<compile_context>
chip_gen: v7x
topology: tpu7x:2x2x1
jax: 0.10.0
libtpu: 0.0.40
codegen_flags: <defaults>
</compile_context>

<pallas_src>
import functools

import jax
import jax.numpy as jnp
from jax.experimental import pallas as pl
from jax.experimental.pallas import tpu as pltpu


# ---------------------------------------------------------------------------
# Pallas kernel
# ---------------------------------------------------------------------------

def _stats_pool_kernel(x_ref, o_ref, sum_ref, ssq_ref, *, inv_n, inv_denom):
    """Grid = (N, R_tiles, L_tiles); x block (1, TR, TL); out block (1, TR, 2)."""
    l = pl.program_id(2)

    @pl.when(l == 0)
    def _init():
        sum_ref[...] = jnp.zeros_like(sum_ref)
        ssq_ref[...] = jnp.zeros_like(ssq_ref)

    # Single pass over this L-tile: running sum and sum-of-squares (f32).
    x = x_ref[0].astype(jnp.float32)                       # (TR, TL)
    sum_ref[...] += jnp.sum(x, axis=-1, keepdims=True)     # (TR, 1)
    ssq_ref[...] += jnp.sum(x * x, axis=-1, keepdims=True) # (TR, 1)

    @pl.when(l == pl.num_programs(2) - 1)
    def _finalize():
        s = sum_ref[...]                                   # (TR, 1)
        mean = s * inv_n
        var = (ssq_ref[...] - s * mean) * inv_denom        # unbiased (torch.std)
        std = jnp.sqrt(jnp.maximum(var, 0.0))              # clamp tiny negatives
        o_ref[...] = jnp.concatenate([mean, std], axis=-1)[None].astype(o_ref.dtype)


# ---------------------------------------------------------------------------
# Wrapper
# ---------------------------------------------------------------------------

def _pick_tile(dim, max_tile, granularity):
    """Largest tile <= max_tile that divides `dim` and is a multiple of
    `granularity`; falls back to the full dim (always a legal block size)."""
    if dim <= max_tile:
        return dim
    t = (max_tile // granularity) * granularity
    while t >= granularity:
        if dim % t == 0:
            return t
        t -= granularity
    return dim


def stats_pool_v2(x, *, max_tile_r=512, max_tile_l=1024):
    """Pallas implementation of StatsPool_v2.forward."""
    assert x.ndim >= 3, "StatsPool_v2 expects at least a 3-D input"
    N = x.shape[0]
    R = x.shape[1] * x.shape[2]
    L = 1
    for d in x.shape[3:]:
        L *= d
    xr = jnp.reshape(x, (N, R, L))          # row-major view: free, no HBM copy

    tile_r = _pick_tile(R, max_tile_r, 128 if R % 128 == 0 else 8)
    tile_l = _pick_tile(L, max_tile_l, 128)

    inv_n = 1.0 / float(L)
    # TODO(synk): torch.std returns NaN when L == 1 (unbiased / (L-1)); we guard
    # with max(L-1, 1) instead of reproducing the NaN.
    inv_denom = 1.0 / float(max(L - 1, 1))

    grid = (N, R // tile_r, L // tile_l)
    kernel = functools.partial(_stats_pool_kernel, inv_n=inv_n, inv_denom=inv_denom)

    out = pl.pallas_call(
        kernel,
        out_shape=jax.ShapeDtypeStruct((N, R, 2), jnp.float32),
        grid_spec=pltpu.PrefetchScalarGridSpec(
            num_scalar_prefetch=0,
            grid=grid,
            in_specs=[pl.BlockSpec((1, tile_r, tile_l), lambda n, r, l: (n, r, l))],
            out_specs=pl.BlockSpec((1, tile_r, 2), lambda n, r, l: (n, r, 0)),
            scratch_shapes=[pltpu.VMEM((tile_r, 1), jnp.float32),   # running sum
                            pltpu.VMEM((tile_r, 1), jnp.float32)],  # running sum sq
        ),
        compiler_params=pltpu.CompilerParams(
            dimension_semantics=("parallel", "parallel", "arbitrary")),
    )(xr)

    # (N, R, 2) -> (N, 2, R) -> (N, 2R)  == torch.cat([mean, std], dim=1)
    # (tiny tensor; this transpose is negligible next to the one pass over x).
    return jnp.transpose(out, (0, 2, 1)).reshape(N, 2 * R)


# ---------------------------------------------------------------------------
# Pure-JAX reference (two-pass, matches the torch math) for validation
# ---------------------------------------------------------------------------

def stats_pool_v2_reference(x):
    N = x.shape[0]
    R = x.shape[1] * x.shape[2]
    xr = jnp.reshape(x, (N, R, -1)).astype(jnp.float32)
    L = xr.shape[-1]
    mean = jnp.mean(xr, axis=-1)
    var = jnp.sum((xr - mean[..., None]) ** 2, axis=-1) / max(L - 1, 1)
    std = jnp.sqrt(var)
    return jnp.concatenate([mean, std], axis=1)


if __name__ == "__main__":
    key = jax.random.PRNGKey(0)
    k1, k2 = jax.random.split(key)

    # Case 1: small shape implied by the module: (N, C, H, W) = (2, 4, 16, 16)
    #   -> view(2, 64, 16) -> output (2, 128)
    x = jax.random.normal(k1, (2, 4, 16, 16), jnp.float32)
    out = jax.block_until_ready(stats_pool_v2(x))
    ref = jax.block_until_ready(stats_pool_v2_reference(x))
    assert out.shape == (2, 2 * 4 * 16), out.shape
    assert bool(jnp.all(jnp.isfinite(out)))
    err = float(jnp.max(jnp.abs(out - ref)))
    assert err < 1e-4, f"case1 max abs error vs reference too large: {err}"

    # Case 2: force a multi-tile grid (N, R-tiles, L-tiles) = (2, 2, 2) to
    # exercise the accumulator / pipelined path.
    x2 = jax.random.normal(k2, (2, 8, 32, 256), jnp.float32)
    out2 = jax.block_until_ready(stats_pool_v2(x2, max_tile_r=128, max_tile_l=128))
    ref2 = jax.block_until_ready(stats_pool_v2_reference(x2))
    assert out2.shape == (2, 2 * 8 * 32), out2.shape
    assert bool(jnp.all(jnp.isfinite(out2)))
    err2 = float(jnp.max(jnp.abs(out2 - ref2)))
    assert err2 < 1e-4, f"case2 max abs error vs reference too large: {err2}"

    print("KERNEL_OK")
</pallas_src>

<mosaic_0001>
module attributes {stable_mosaic.version = 11 : i64} {
  func.func @_stats_pool_kernel(%arg0: i32, %arg1: i32, %arg2: i32, %arg3: memref<1x64x16xf32, #tpu.memory_space<vmem>>, %arg4: memref<1x64x2xf32, #tpu.memory_space<vmem>>, %arg5: memref<64x1xf32, #tpu.memory_space<vmem>>, %arg6: memref<64x1xf32, #tpu.memory_space<vmem>>) attributes {dimension_semantics = [#tpu.dimension_semantics<parallel>, #tpu.dimension_semantics<parallel>, #tpu.dimension_semantics<arbitrary>], iteration_bounds = array<i64: 2, 1, 1>, scalar_prefetch = 0 : i64, scratch_operands = 2 : i64, tpu.core_type = #tpu.core_type<tc>, window_params = [{transform_indices = @transform_0, window_bounds = array<i64: 1, 64, 16>}, {transform_indices = @transform_1, window_bounds = array<i64: 1, 64, 2>}]} {
    %c0_i32 = arith.constant 0 : i32
    %0 = arith.cmpi eq, %arg2, %c0_i32 : i32
    %1 = arith.extui %0 : i1 to i32
    %c0_i32_0 = arith.constant 0 : i32
    %2 = arith.cmpi ne, %1, %c0_i32_0 : i32
    scf.if %2 {
      %cst_14 = arith.constant 0.000000e+00 : f32
      %19 = vector.broadcast %cst_14 : f32 to vector<64x1xf32>
      %c0_15 = arith.constant 0 : index
      %c0_16 = arith.constant 0 : index
      %20 = vector.load %arg5[%c0_15, %c0_16] : memref<64x1xf32, #tpu.memory_space<vmem>>, vector<64x1xf32>
      tpu.vector_store %arg5[%c0_15, %c0_16], %19 {strides = array<i32>} : memref<64x1xf32, #tpu.memory_space<vmem>>, vector<64x1xf32>,
      %cst_17 = arith.constant 0.000000e+00 : f32
      %21 = vector.broadcast %cst_17 : f32 to vector<64x1xf32>
      %c0_18 = arith.constant 0 : index
      %c0_19 = arith.constant 0 : index
      %22 = vector.load %arg6[%c0_18, %c0_19] : memref<64x1xf32, #tpu.memory_space<vmem>>, vector<64x1xf32>
      tpu.vector_store %arg6[%c0_18, %c0_19], %21 {strides = array<i32>} : memref<64x1xf32, #tpu.memory_space<vmem>>, vector<64x1xf32>,
    } else {
    }
    %c0 = arith.constant 0 : index
    %c0_1 = arith.constant 0 : index
    %c0_2 = arith.constant 0 : index
    %3 = vector.load %arg3[%c0, %c0_1, %c0_2] : memref<1x64x16xf32, #tpu.memory_space<vmem>>, vector<1x64x16xf32>
    %4 = vector.shape_cast %3 : vector<1x64x16xf32> to vector<64x16xf32>
    %c0_3 = arith.constant 0 : index
    %c0_4 = arith.constant 0 : index
    %5 = vector.load %arg5[%c0_3, %c0_4] : memref<64x1xf32, #tpu.memory_space<vmem>>, vector<64x1xf32>
    %cst = arith.constant dense<0.000000e+00> : vector<64xf32>
    %6 = vector.multi_reduction <add>, %4, %cst [1] : vector<64x16xf32> to vector<64xf32>
    %7 = vector.shape_cast %6 : vector<64xf32> to vector<64x1xf32>
    %8 = arith.addf %5, %7 : vector<64x1xf32>
    %c0_5 = arith.constant 0 : index
    %c0_6 = arith.constant 0 : index
    %9 = vector.load %arg5[%c0_5, %c0_6] : memref<64x1xf32, #tpu.memory_space<vmem>>, vector<64x1xf32>
    tpu.vector_store %arg5[%c0_5, %c0_6], %8 {strides = array<i32>} : memref<64x1xf32, #tpu.memory_space<vmem>>, vector<64x1xf32>,
    %c0_7 = arith.constant 0 : index
    %c0_8 = arith.constant 0 : index
    %10 = vector.load %arg6[%c0_7, %c0_8] : memref<64x1xf32, #tpu.memory_space<vmem>>, vector<64x1xf32>
    %11 = arith.mulf %4, %4 : vector<64x16xf32>
    %cst_9 = arith.constant dense<0.000000e+00> : vector<64xf32>
    %12 = vector.multi_reduction <add>, %11, %cst_9 [1] : vector<64x16xf32> to vector<64xf32>
    %13 = vector.shape_cast %12 : vector<64xf32> to vector<64x1xf32>
    %14 = arith.addf %10, %13 : vector<64x1xf32>
    %c0_10 = arith.constant 0 : index
    %c0_11 = arith.constant 0 : index
    %15 = vector.load %arg6[%c0_10, %c0_11] : memref<64x1xf32, #tpu.memory_space<vmem>>, vector<64x1xf32>
    tpu.vector_store %arg6[%c0_10, %c0_11], %14 {strides = array<i32>} : memref<64x1xf32, #tpu.memory_space<vmem>>, vector<64x1xf32>,
    %c0_i32_12 = arith.constant 0 : i32
    %16 = arith.cmpi eq, %arg2, %c0_i32_12 : i32
    %17 = arith.extui %16 : i1 to i32
    %c0_i32_13 = arith.constant 0 : i32
    %18 = arith.cmpi ne, %17, %c0_i32_13 : i32
    scf.if %18 {
      %c0_14 = arith.constant 0 : index
      %c0_15 = arith.constant 0 : index
      %19 = vector.load %arg5[%c0_14, %c0_15] : memref<64x1xf32, #tpu.memory_space<vmem>>, vector<64x1xf32>
      %cst_16 = arith.constant 6.250000e-02 : f32
      %20 = vector.broadcast %cst_16 : f32 to vector<64x1xf32>
      %21 = arith.mulf %19, %20 : vector<64x1xf32>
      %c0_17 = arith.constant 0 : index
      %c0_18 = arith.constant 0 : index
      %22 = vector.load %arg6[%c0_17, %c0_18] : memref<64x1xf32, #tpu.memory_space<vmem>>, vector<64x1xf32>
      %23 = arith.mulf %19, %21 : vector<64x1xf32>
      %24 = arith.subf %22, %23 : vector<64x1xf32>
      %cst_19 = arith.constant 0.0666666701 : f32
      %25 = vector.broadcast %cst_19 : f32 to vector<64x1xf32>
      %26 = arith.mulf %24, %25 : vector<64x1xf32>
      %cst_20 = arith.constant 0.000000e+00 : f32
      %27 = vector.broadcast %cst_20 : f32 to vector<64x1xf32>
      %28 = arith.maximumf %26, %27 : vector<64x1xf32>
      %29 = math.sqrt %28 : vector<64x1xf32>
      %30 = tpu.concatenate %21, %29 in 1 : vector<64x1xf32>, vector<64x1xf32> -> vector<64x2xf32>
      %31 = vector.shape_cast %30 : vector<64x2xf32> to vector<1x64x2xf32>
      %c0_21 = arith.constant 0 : index
      %c0_22 = arith.constant 0 : index
      %c0_23 = arith.constant 0 : index
      %32 = vector.load %arg4[%c0_21, %c0_22, %c0_23] : memref<1x64x2xf32, #tpu.memory_space<vmem>>, vector<1x64x2xf32>
      tpu.vector_store %arg4[%c0_21, %c0_22, %c0_23], %31 {strides = array<i32>} : memref<1x64x2xf32, #tpu.memory_space<vmem>>, vector<1x64x2xf32>,
    } else {
    }
    return
  }
  func.func @transform_0(%arg0: i32, %arg1: i32, %arg2: i32) -> (i32, i32, i32) {
    %c0_i32 = arith.constant 0 : i32
    return %arg0, %arg1, %arg2 : i32, i32, i32
  }
  func.func @transform_1(%arg0: i32, %arg1: i32, %arg2: i32) -> (i32, i32, i32) {
    %c0_i32 = arith.constant 0 : i32
    %c0_i32_0 = arith.constant 0 : i32
    return %arg0, %arg1, %c0_i32 : i32, i32, i32
  }
}

</mosaic_0001>

<llo_original>
// kernel: tpu_custom_call.1
$region0: #{tpu_custom_call.1}
  #allocation0 [shape = 'u32[]', space=smem, size = 0x4, offset = 0x4, fixed_abs, tag = 'smem constant byte address 0x4 - core index']
  #allocation1 [shape = 'u32[144,128]{1,0:T(1,128)}', space=vmem, size = 0x12000, scoped, tag = 'internal scratch']
  #allocation2 [shape = 'f32[64,1]{1,0:T(8,128)}', space=vmem, size = 0x8000, scoped, tag = 'scratch operand']
  #allocation3 [shape = 'f32[64,1]{1,0:T(8,128)}', space=vmem, size = 0x8000, scoped, tag = 'scratch operand']
  %s0 = inlined_call_operand.vmem [shape: f32[2,64,16], index: 0, kind: input, shape index: {}]
  %s1 = inlined_call_operand.vmem [shape: f32[2,64,2], index: 1, kind: output, shape index: {}]
  %s2 = sld [smem:[#allocation0]]
  $region45: #{tpu_custom_call.1} parent=0
    _
  %s4 = ssub.s32 1, %s2
  %s5 = scalar_select 0, %s4, %s2
  loop: start=0, step=1, limit=4
  $region2: #{tpu_custom_call.1} parent=0 // loop_pre_header
    _
  $region3: #{tpu_custom_call.1} parent=0 // loop_header
    %s7 = sphi 0, %s11
    %p8 = scmp.ge.s32.totalorder %s7, 4
    %s14 = sphi 0, %s33
    %s15 = sphi 0, %s29
    %s16 = sphi 0, %s25
    %s17 = sphi 0, %s14
    %s18 = sphi 0, %s15
    %s19 = sphi 0, %s16
    %s20 = sphi 0, %s17
    %s21 = sphi 0, %s18
    %s22 = sphi 0, %s19
    %s40 = sphi 0, %s42
    %s43 = sphi 0, %s40
    %s44 = sphi 0, %s43
    %s60 = sphi 0, %s44
    %s68 = sphi 0, %s70
    %s71 = sphi 0, %s68
    %s72 = sphi 0, %s71
    %s88 = sphi 0, %s72
  $region4: #{tpu_custom_call.1} parent=0 // loop_header_branch
    %10 = sbr.rel (%p8) target = $region8
  $region5: #{tpu_custom_call.1} parent=0 // loop_body
    %s12 = ssub.s32 %s7, 1
    %s13 = ssub.s32 %s7, 2
    %s23 = sadd.s32 1, %s16
    %p24 = scmp.ge.s32.totalorder %s23, 1
    %s25 = scalar_select %p24, 0, %s23
    %s26 = sadd.s32 1, %s15
    %s27 = scalar_select %p24, %s26, %s15
    %p28 = scmp.ge.s32.totalorder %s27, 1
    %s29 = scalar_select %p28, 0, %s27
    %s30 = sadd.s32 1, %s14
    %s31 = scalar_select %p28, %s30, %s14
    %p32 = scmp.ge.s32.totalorder %s31, 2
    %s33 = scalar_select %p32, 0, %s31
    %s34 = ssub.s32 %s14, %s33
    %s35 = ssub.s32 %s15, %s29
    %s36 = sor.u32 %s34, %s35
    %s37 = ssub.s32 %s16, %s25
    %s38 = sor.u32 %s36, %s37
    %p39 = scmp.eq.s32.totalorder %s38, 0
    %s41 = sadd.s32 %s40, 1
    %s42 = scalar_select %p39, %s40, %s41
    %p45 = pneg %p39
    %p46 = scmp.eq.s32.totalorder %s7, 1
    %p47 = por %p45, %p46
    %p48 = scmp.ne.s32.totalorder %s40, %s43
    %p49 = scmp.eq.s32.totalorder %s7, 0
    %p50 = por %p48, %p49
    %p51 = scmp.ne.s32.totalorder %s40, %s43
    %p52 = scmp.eq.s32.totalorder %s12, 1
    %p53 = por %p51, %p52
    %p54 = scmp.ne.s32.totalorder %s43, %s44
    %p55 = scmp.eq.s32.totalorder %s12, 0
    %p56 = por %p54, %p55
    %p57 = scmp.ne.s32.totalorder %s43, %s44
    %p58 = scmp.eq.s32.totalorder %s13, 1
    %p59 = por %p57, %p58
    %p61 = scmp.ne.s32.totalorder %s44, %s60
    %p62 = scmp.eq.s32.totalorder %s13, 0
    %p63 = por %p61, %p62
    %s64 = ssub.s32 %s14, %s33
    %s65 = ssub.s32 %s15, %s29
    %s66 = sor.u32 %s64, %s65
    %p67 = scmp.eq.s32.totalorder %s66, 0
    %s69 = sadd.s32 %s68, 1
    %s70 = scalar_select %p67, %s68, %s69
    %p73 = pneg %p67
    %p74 = scmp.eq.s32.totalorder %s7, 1
    %p75 = por %p73, %p74
    %p76 = scmp.ne.s32.totalorder %s68, %s71
    %p77 = scmp.eq.s32.totalorder %s7, 0
    %p78 = por %p76, %p77
    %p79 = scmp.ne.s32.totalorder %s68, %s71
    %p80 = scmp.eq.s32.totalorder %s12, 1
    %p81 = por %p79, %p80
    %p82 = scmp.ne.s32.totalorder %s71, %s72
    %p83 = scmp.eq.s32.totalorder %s12, 0
    %p84 = por %p82, %p83
    %p85 = scmp.ne.s32.totalorder %s71, %s72
    %p86 = scmp.eq.s32.totalorder %s13, 1
    %p87 = por %p85, %p86
    %p89 = scmp.ne.s32.totalorder %s72, %s88
    %p90 = scmp.eq.s32.totalorder %s13, 0
    %p91 = por %p89, %p90
    %p92 = scmp.le.s32.totalorder 1, %s7
    %p93 = scmp.lt.s32.totalorder %s7, 3
    %p94 = pnand %p92, %p93
    %p95 = pneg %p94
    // Predicated region
    $region9: #{tpu_custom_call.1} parent=5 // pred_check
      _
    $region10: #{tpu_custom_call.1} parent=5 // pred_check_branch
      %97 = sbr.rel (%p94) target = $region12
    $region11: #{tpu_custom_call.1} parent=5 // pred_region
      %s98 = ssub.s32 %s7, 1
    $region12: #{tpu_custom_call.1} parent=5 // pred_fallthru
      _
    %p99 = scmp.lt.s32.totalorder %s7, 2
    // Predicated region
    $region13: #{tpu_custom_call.1} parent=5 // pred_check
      %p100 = pneg %p99
    $region14: #{tpu_custom_call.1} parent=5 // pred_check_branch
      %102 = sbr.rel (%p100) target = $region16
    $region15: #{tpu_custom_call.1} parent=5 // pred_region
      // Predicated region
      $region17: #{tpu_custom_call.1} parent=15 // pred_check
        %p103 = pneg %p50
      $region18: #{tpu_custom_call.1} parent=15 // pred_check_branch
        %105 = sbr.rel (%p103) target = $region20
      $region19: #{tpu_custom_call.1} parent=15 // pred_region
        %s106 = smul.u32 8, %s15
        %p107 = scmp.lt.s32.totalorder %s14, 1
        %s108 = scalar_select %p107, %s14, 1
        %p109 = scmp.lt.s32.totalorder %s106, 7
        %s110 = scalar_select %p109, %s106, 7
        %p111 = scmp.lt.s32.totalorder %s16, 0
        %s112 = scalar_select %p111, %s16, 0
        %s113 = sadd.s32 %s112, %s110
        %s114 = smul.addr %s108, 8
        %s115 = sadd.s32 %s113, %s114
        %s116 = smul.addr %s115, 8
        %s117 = scalar_lea.vmem %s0, %s116
        %s118 = smul.u32 8, %s15
      $region20: #{tpu_custom_call.1} parent=15 // pred_fallthru
        _
    $region16: #{tpu_custom_call.1} parent=5 // pred_fallthru
      _
    %p119 = scmp.le.s32.totalorder 1, %s7
    %p120 = scmp.lt.s32.totalorder %s7, 3
    %p121 = pnand %p119, %p120
    %p122 = pneg %p121
    // Predicated region
    $region21: #{tpu_custom_call.1} parent=5 // pred_check
      _
    $region22: #{tpu_custom_call.1} parent=5 // pred_check_branch
      %124 = sbr.rel (%p121) target = $region24
    $region23: #{tpu_custom_call.1} parent=5 // pred_region
      %s125 = ssub.s32 %s7, 1
      %s126 = smul.u32 8, %s18
      %p127 = scmp.lt.s32.totalorder %s17, 1
      %s128 = scalar_select %p127, %s17, 1
      %p129 = scmp.lt.s32.totalorder %s126, 7
      %s130 = scalar_select %p129, %s126, 7
      %p131 = scmp.lt.s32.totalorder %s19, 0
      %s132 = scalar_select %p131, %s19, 0
      %s133 = sadd.s32 %s132, %s130
      %s134 = smul.addr %s128, 8
      %s135 = sadd.s32 %s133, %s134
      %s136 = smul.addr %s135, 8
      %s137 = scalar_lea.vmem %s0, %s136
      %p138 = pneg %p56
      %p139 = pneg %p53
      %p140 = pneg %p84
      %p141 = pneg %p81
      %s142 = smul.u32 8, %s18
      %p143 = scmp.lt.s32.totalorder %s17, 1
      %s144 = scalar_select %p143, %s17, 1
      %p145 = scmp.lt.s32.totalorder %s142, 7
      %s146 = scalar_select %p145, %s142, 7
      %s147 = smul.addr %s144, 8
      %s148 = sadd.s32 %s146, %s147
      %s149 = smul.addr %s148, 8
      %s150 = scalar_lea.vmem %s1, %s149
      %s151 = smul.u32 8, %s18
      %p152 = scmp.lt.s32.totalorder %s17, 1
      %s153 = scalar_select %p152, %s17, 1
      %p154 = scmp.lt.s32.totalorder %s151, 7
      %s155 = scalar_select %p154, %s151, 7
      %p156 = scmp.lt.s32.totalorder %s19, 0
      %s157 = scalar_select %p156, %s19, 0
      %s158 = sadd.s32 %s157, %s155
      %s159 = smul.addr %s153, 8
      %s160 = sadd.s32 %s158, %s159
      %s161 = smul.addr %s160, 8
      %s162 = scalar_lea.vmem %s0, %s161
      %s163 = smul.u32 8, %s18
      %s164 = smul.u32 8, %s18
      %p165 = scmp.lt.s32.totalorder %s17, 1
      %s166 = scalar_select %p165, %s17, 1
      %p167 = scmp.lt.s32.totalorder %s164, 7
      %s168 = scalar_select %p167, %s164, 7
      %s169 = smul.addr %s166, 8
      %s170 = sadd.s32 %s168, %s169
      %s171 = smul.addr %s170, 8
      %s172 = scalar_lea.vmem %s1, %s171
      %s173 = smul.u32 8, %s18
      %p174 = scmp.eq.s32.totalorder %s19, 0
      // Predicated region
      $region25: #{tpu_custom_call.1} parent=23 // pred_check
        %p175 = pneg %p174
      $region26: #{tpu_custom_call.1} parent=23 // pred_check_branch
        %177 = sbr.rel (%p175) target = $region28
      $region27: #{tpu_custom_call.1} parent=23 // pred_region
        %vm178 = vcmask 7168
        %179 = vst.msk [vmem:[#allocation2] sm:$0xff] %vm178, 0.0
        %180 = vst.msk [vmem:[#allocation2 + $0x8] sm:$0xff] %vm178, 0.0
        %181 = vst.msk [vmem:[#allocation2 + $0x10] sm:$0xff] %vm178, 0.0
        %182 = vst.msk [vmem:[#allocation2 + $0x18] sm:$0xff] %vm178, 0.0
        %183 = vst.msk [vmem:[#allocation2 + $0x20] sm:$0xff] %vm178, 0.0
        %184 = vst.msk [vmem:[#allocation2 + $0x28] sm:$0xff] %vm178, 0.0
        %185 = vst.msk [vmem:[#allocation2 + $0x30] sm:$0xff] %vm178, 0.0
        %186 = vst.msk [vmem:[#allocation2 + $0x38] sm:$0xff] %vm178, 0.0
        %187 = vst.msk [vmem:[#allocation3] sm:$0xff] %vm178, 0.0
        %188 = vst.msk [vmem:[#allocation3 + $0x8] sm:$0xff] %vm178, 0.0
        %189 = vst.msk [vmem:[#allocation3 + $0x10] sm:$0xff] %vm178, 0.0
        %190 = vst.msk [vmem:[#allocation3 + $0x18] sm:$0xff] %vm178, 0.0
        %191 = vst.msk [vmem:[#allocation3 + $0x20] sm:$0xff] %vm178, 0.0
        %192 = vst.msk [vmem:[#allocation3 + $0x28] sm:$0xff] %vm178, 0.0
        %193 = vst.msk [vmem:[#allocation3 + $0x30] sm:$0xff] %vm178, 0.0
        %194 = vst.msk [vmem:[#allocation3 + $0x38] sm:$0xff] %vm178, 0.0
      $region28: #{tpu_custom_call.1} parent=23 // pred_fallthru
        _
      %v195 = vld [vmem:[%s162] sm:$0xff]
      %v196 = vld [vmem:[%s162 + $0x8] sm:$0xff]
      %v197 = vld [vmem:[%s162 + $0x10] sm:$0xff]
      %v198 = vld [vmem:[%s162 + $0x18] sm:$0xff]
      %v199 = vld [vmem:[%s162 + $0x20] sm:$0xff]
      %v200 = vld [vmem:[%s162 + $0x28] sm:$0xff]
      %v201 = vld [vmem:[%s162 + $0x30] sm:$0xff]
      %v202 = vld [vmem:[%s162 + $0x38] sm:$0xff]
      %v203 = vld [vmem:[#allocation2] sm:$0xff]
      %v204 = vld [vmem:[#allocation2 + $0x8] sm:$0xff]
      %v205 = vld [vmem:[#allocation2 + $0x10] sm:$0xff]
      %v206 = vld [vmem:[#allocation2 + $0x18] sm:$0xff]
      %v207 = vld [vmem:[#allocation2 + $0x20] sm:$0xff]
      %v208 = vld [vmem:[#allocation2 + $0x28] sm:$0xff]
      %v209 = vld [vmem:[#allocation2 + $0x30] sm:$0xff]
      %v210 = vld [vmem:[#allocation2 + $0x38] sm:$0xff]
      %vm211 = vcmask 130048
      %v212 = vsel %vm211, %v195, 0.0
      %213 = vadd.xlane.f32.xlu0 %v212
      %v214 = vpop.xlane.xlu0 %213
      %v215 = vsel %vm211, %v196, 0.0
      %216 = vadd.xlane.f32.xlu0 %v215
      %v217 = vpop.xlane.xlu0 %216
      %v218 = vsel %vm211, %v197, 0.0
      %219 = vadd.xlane.f32.xlu0 %v218
      %v220 = vpop.xlane.xlu0 %219
      %v221 = vsel %vm211, %v198, 0.0
      %222 = vadd.xlane.f32.xlu0 %v221
      %v223 = vpop.xlane.xlu0 %222
      %v224 = vsel %vm211, %v199, 0.0
      %225 = vadd.xlane.f32.xlu0 %v224
      %v226 = vpop.xlane.xlu0 %225
      %v227 = vsel %vm211, %v200, 0.0
      %228 = vadd.xlane.f32.xlu0 %v227
      %v229 = vpop.xlane.xlu0 %228
      %v230 = vsel %vm211, %v201, 0.0
      %231 = vadd.xlane.f32.xlu0 %v230
      %v232 = vpop.xlane.xlu0 %231
      %v233 = vsel %vm211, %v202, 0.0
      %234 = vadd.xlane.f32.xlu0 %v233
      %v235 = vpop.xlane.xlu0 %234
      %v236 = vadd.f32 %v203, %v214
      %v237 = vadd.f32 %v204, %v217
      %v238 = vadd.f32 %v205, %v220
      %v239 = vadd.f32 %v206, %v223
      %v240 = vadd.f32 %v207, %v226
      %v241 = vadd.f32 %v208, %v229
      %v242 = vadd.f32 %v209, %v232
      %v243 = vadd.f32 %v210, %v235
      %vm244 = vcmask 7168
      %245 = vst.msk [vmem:[#allocation2] sm:$0xff] %vm244, %v236
      %246 = vst.msk [vmem:[#allocation2 + $0x8] sm:$0xff] %vm244, %v237
      %247 = vst.msk [vmem:[#allocation2 + $0x10] sm:$0xff] %vm244, %v238
      %248 = vst.msk [vmem:[#allocation2 + $0x18] sm:$0xff] %vm244, %v239
      %249 = vst.msk [vmem:[#allocation2 + $0x20] sm:$0xff] %vm244, %v240
      %250 = vst.msk [vmem:[#allocation2 + $0x28] sm:$0xff] %vm244, %v241
      %251 = vst.msk [vmem:[#allocation2 + $0x30] sm:$0xff] %vm244, %v242
      %252 = vst.msk [vmem:[#allocation2 + $0x38] sm:$0xff] %vm244, %v243
      %v253 = vld [vmem:[#allocation3] sm:$0xff]
      %v254 = vld [vmem:[#allocation3 + $0x8] sm:$0xff]
      %v255 = vld [vmem:[#allocation3 + $0x10] sm:$0xff]
      %v256 = vld [vmem:[#allocation3 + $0x18] sm:$0xff]
      %v257 = vld [vmem:[#allocation3 + $0x20] sm:$0xff]
      %v258 = vld [vmem:[#allocation3 + $0x28] sm:$0xff]
      %v259 = vld [vmem:[#allocation3 + $0x30] sm:$0xff]
      %v260 = vld [vmem:[#allocation3 + $0x38] sm:$0xff]
      %v261 = vmul.f32 %v195, %v195
      %v262 = vmul.f32 %v196, %v196
      %v263 = vmul.f32 %v197, %v197
      %v264 = vmul.f32 %v198, %v198
      %v265 = vmul.f32 %v199, %v199
      %v266 = vmul.f32 %v200, %v200
      %v267 = vmul.f32 %v201, %v201
      %v268 = vmul.f32 %v202, %v202
      %v269 = vsel %vm211, %v261, 0.0
      %270 = vadd.xlane.f32.xlu0 %v269
      %v271 = vpop.xlane.xlu0 %270
      %v272 = vsel %vm211, %v262, 0.0
      %273 = vadd.xlane.f32.xlu0 %v272
      %v274 = vpop.xlane.xlu0 %273
      %v275 = vsel %vm211, %v263, 0.0
      %276 = vadd.xlane.f32.xlu0 %v275
      %v277 = vpop.xlane.xlu0 %276
      %v278 = vsel %vm211, %v264, 0.0
      %279 = vadd.xlane.f32.xlu0 %v278
      %v280 = vpop.xlane.xlu0 %279
      %v281 = vsel %vm211, %v265, 0.0
      %282 = vadd.xlane.f32.xlu0 %v281
      %v283 = vpop.xlane.xlu0 %282
      %v284 = vsel %vm211, %v266, 0.0
      %285 = vadd.xlane.f32.xlu0 %v284
      %v286 = vpop.xlane.xlu0 %285
      %v287 = vsel %vm211, %v267, 0.0
      %288 = vadd.xlane.f32.xlu0 %v287
      %v289 = vpop.xlane.xlu0 %288
      %v290 = vsel %vm211, %v268, 0.0
      %291 = vadd.xlane.f32.xlu0 %v290
      %v292 = vpop.xlane.xlu0 %291
      %v293 = vadd.f32 %v253, %v271
      %v294 = vadd.f32 %v254, %v274
      %v295 = vadd.f32 %v255, %v277
      %v296 = vadd.f32 %v256, %v280
      %v297 = vadd.f32 %v257, %v283
      %v298 = vadd.f32 %v258, %v286
      %v299 = vadd.f32 %v259, %v289
      %v300 = vadd.f32 %v260, %v292
      %301 = vst.msk [vmem:[#allocation3] sm:$0xff] %vm244, %v293
      %302 = vst.msk [vmem:[#allocation3 + $0x8] sm:$0xff] %vm244, %v294
      %303 = vst.msk [vmem:[#allocation3 + $0x10] sm:$0xff] %vm244, %v295
      %304 = vst.msk [vmem:[#allocation3 + $0x18] sm:$0xff] %vm244, %v296
      %305 = vst.msk [vmem:[#allocation3 + $0x20] sm:$0xff] %vm244, %v297
      %306 = vst.msk [vmem:[#allocation3 + $0x28] sm:$0xff] %vm244, %v298
      %307 = vst.msk [vmem:[#allocation3 + $0x30] sm:$0xff] %vm244, %v299
      %308 = vst.msk [vmem:[#allocation3 + $0x38] sm:$0xff] %vm244, %v300
      // Predicated region
      $region29: #{tpu_custom_call.1} parent=23 // pred_check
        %p309 = pneg %p174
      $region30: #{tpu_custom_call.1} parent=23 // pred_check_branch
        %311 = sbr.rel (%p309) target = $region32
      $region31: #{tpu_custom_call.1} parent=23 // pred_region
        %v312 = vld [vmem:[#allocation2] sm:$0xff]
        %v313 = vld [vmem:[#allocation2 + $0x8] sm:$0xff]
        %v314 = vld [vmem:[#allocation2 + $0x10] sm:$0xff]
        %v315 = vld [vmem:[#allocation2 + $0x18] sm:$0xff]
        %v316 = vld [vmem:[#allocation2 + $0x20] sm:$0xff]
        %v317 = vld [vmem:[#allocation2 + $0x28] sm:$0xff]
        %v318 = vld [vmem:[#allocation2 + $0x30] sm:$0xff]
        %v319 = vld [vmem:[#allocation2 + $0x38] sm:$0xff]
        %v320 = vmul.f32 %v312, 0.0625
        %v321 = vmul.f32 %v313, 0.0625
        %v322 = vmul.f32 %v314, 0.0625
        %v323 = vmul.f32 %v315, 0.0625
        %v324 = vmul.f32 %v316, 0.0625
        %v325 = vmul.f32 %v317, 0.0625
        %v326 = vmul.f32 %v318, 0.0625
        %v327 = vmul.f32 %v319, 0.0625
        %v328 = vld [vmem:[#allocation3] sm:$0xff]
        %v329 = vld [vmem:[#allocation3 + $0x8] sm:$0xff]
        %v330 = vld [vmem:[#allocation3 + $0x10] sm:$0xff]
        %v331 = vld [vmem:[#allocation3 + $0x18] sm:$0xff]
        %v332 = vld [vmem:[#allocation3 + $0x20] sm:$0xff]
        %v333 = vld [vmem:[#allocation3 + $0x28] sm:$0xff]
        %v334 = vld [vmem:[#allocation3 + $0x30] sm:$0xff]
        %v335 = vld [vmem:[#allocation3 + $0x38] sm:$0xff]
        %v336 = vmul.f32 %v312, %v320
        %v337 = vmul.f32 %v313, %v321
        %v338 = vmul.f32 %v314, %v322
        %v339 = vmul.f32 %v315, %v323
        %v340 = vmul.f32 %v316, %v324
        %v341 = vmul.f32 %v317, %v325
        %v342 = vmul.f32 %v318, %v326
        %v343 = vmul.f32 %v319, %v327
        %v344 = vsub.f32 %v328, %v336
        %v345 = vsub.f32 %v329, %v337
        %v346 = vsub.f32 %v330, %v338
        %v347 = vsub.f32 %v331, %v339
        %v348 = vsub.f32 %v332, %v340
        %v349 = vsub.f32 %v333, %v341
        %v350 = vsub.f32 %v334, %v342
        %v351 = vsub.f32 %v335, %v343
        %v352 = vmul.f32 %v344, 0.06666667
        %v353 = vmul.f32 %v345, 0.06666667
        %v354 = vmul.f32 %v346, 0.06666667
        %v355 = vmul.f32 %v347, 0.06666667
        %v356 = vmul.f32 %v348, 0.06666667
        %v357 = vmul.f32 %v349, 0.06666667
        %v358 = vmul.f32 %v350, 0.06666667
        %v359 = vmul.f32 %v351, 0.06666667
        %v360 = vmax.f32 %v352, 0.0
        %v361 = vmax.f32 %v353, 0.0
        %v362 = vmax.f32 %v354, 0.0
        %v363 = vmax.f32 %v355, 0.0
        %v364 = vmax.f32 %v356, 0.0
        %v365 = vmax.f32 %v357, 0.0
        %v366 = vmax.f32 %v358, 0.0
        %v367 = vmax.f32 %v359, 0.0
        %v368 = vrsqrt.pop %v360
        %v369 = vmul.f32 %v360, %v368
        %vm370 = vcmp.eq.f32.partialorder %v360, inf
        %v371 = vsel %vm370, %v360, %v369
        %vm372 = vcmp.eq.f32.partialorder %v360, 0.0
        %v373 = vand.u32 %v360, 2147483648
        %v374 = vsel %vm372, %v373, %v371
        %v375 = vrsqrt.pop %v361
        %v376 = vmul.f32 %v361, %v375
        %vm377 = vcmp.eq.f32.partialorder %v361, inf
        %v378 = vsel %vm377, %v361, %v376
        %vm379 = vcmp.eq.f32.partialorder %v361, 0.0
        %v380 = vand.u32 %v361, 2147483648
        %v381 = vsel %vm379, %v380, %v378
        %v382 = vrsqrt.pop %v362
        %v383 = vmul.f32 %v362, %v382
        %vm384 = vcmp.eq.f32.partialorder %v362, inf
        %v385 = vsel %vm384, %v362, %v383
        %vm386 = vcmp.eq.f32.partialorder %v362, 0.0
        %v387 = vand.u32 %v362, 2147483648
        %v388 = vsel %vm386, %v387, %v385
        %v389 = vrsqrt.pop %v363
        %v390 = vmul.f32 %v363, %v389
        %vm391 = vcmp.eq.f32.partialorder %v363, inf
        %v392 = vsel %vm391, %v363, %v390
        %vm393 = vcmp.eq.f32.partialorder %v363, 0.0
        %v394 = vand.u32 %v363, 2147483648
        %v395 = vsel %vm393, %v394, %v392
        %v396 = vrsqrt.pop %v364
        %v397 = vmul.f32 %v364, %v396
        %vm398 = vcmp.eq.f32.partialorder %v364, inf
        %v399 = vsel %vm398, %v364, %v397
        %vm400 = vcmp.eq.f32.partialorder %v364, 0.0
        %v401 = vand.u32 %v364, 2147483648
        %v402 = vsel %vm400, %v401, %v399
        %v403 = vrsqrt.pop %v365
        %v404 = vmul.f32 %v365, %v403
        %vm405 = vcmp.eq.f32.partialorder %v365, inf
        %v406 = vsel %vm405, %v365, %v404
        %vm407 = vcmp.eq.f32.partialorder %v365, 0.0
        %v408 = vand.u32 %v365, 2147483648
        %v409 = vsel %vm407, %v408, %v406
        %v410 = vrsqrt.pop %v366
        %v411 = vmul.f32 %v366, %v410
        %vm412 = vcmp.eq.f32.partialorder %v366, inf
        %v413 = vsel %vm412, %v366, %v411
        %vm414 = vcmp.eq.f32.partialorder %v366, 0.0
        %v415 = vand.u32 %v366, 2147483648
        %v416 = vsel %vm414, %v415, %v413
        %v417 = vrsqrt.pop %v367
        %v418 = vmul.f32 %v367, %v417
        %vm419 = vcmp.eq.f32.partialorder %v367, inf
        %v420 = vsel %vm419, %v367, %v418
        %vm421 = vcmp.eq.f32.partialorder %v367, 0.0
        %v422 = vand.u32 %v367, 2147483648
        %v423 = vsel %vm421, %v422, %v420
        %432 = vrot.lane.b32.xlu0 %v374, 1
        %v433 = vpop.permute.xlu0 %432
        %434 = vrot.lane.b32.xlu0 %v381, 1
        %v435 = vpop.permute.xlu0 %434
        %436 = vrot.lane.b32.xlu0 %v388, 1
        %v437 = vpop.permute.xlu0 %436
        %438 = vrot.lane.b32.xlu0 %v395, 1
        %v439 = vpop.permute.xlu0 %438
        %440 = vrot.lane.b32.xlu0 %v402, 1
        %v441 = vpop.permute.xlu0 %440
        %442 = vrot.lane.b32.xlu0 %v409, 1
        %v443 = vpop.permute.xlu0 %442
        %444 = vrot.lane.b32.xlu0 %v416, 1
        %v445 = vpop.permute.xlu0 %444
        %446 = vrot.lane.b32.xlu0 %v423, 1
        %v447 = vpop.permute.xlu0 %446
        %v456 = vsel %vm244, %v320, %v433
        %v457 = vsel %vm244, %v321, %v435
        %v458 = vsel %vm244, %v322, %v437
        %v459 = vsel %vm244, %v323, %v439
        %v460 = vsel %vm244, %v324, %v441
        %v461 = vsel %vm244, %v325, %v443
        %v462 = vsel %vm244, %v326, %v445
        %v463 = vsel %vm244, %v327, %v447
        %vm464 = vcmask 15360
        %465 = vst.msk [vmem:[%s172] sm:$0xff] %vm464, %v456
        %466 = vst.msk [vmem:[%s172 + $0x8] sm:$0xff] %vm464, %v457
        %467 = vst.msk [vmem:[%s172 + $0x10] sm:$0xff] %vm464, %v458
        %468 = vst.msk [vmem:[%s172 + $0x18] sm:$0xff] %vm464, %v459
        %469 = vst.msk [vmem:[%s172 + $0x20] sm:$0xff] %vm464, %v460
        %470 = vst.msk [vmem:[%s172 + $0x28] sm:$0xff] %vm464, %v461
        %471 = vst.msk [vmem:[%s172 + $0x30] sm:$0xff] %vm464, %v462
        %472 = vst.msk [vmem:[%s172 + $0x38] sm:$0xff] %vm464, %v463
      $region32: #{tpu_custom_call.1} parent=23 // pred_fallthru
        _
      %s473 = smul.u32 8, %s18
      %p474 = scmp.lt.s32.totalorder %s17, 1
      %s475 = scalar_select %p474, %s17, 1
      %p476 = scmp.lt.s32.totalorder %s473, 7
      %s477 = scalar_select %p476, %s473, 7
      %s478 = smul.addr %s475, 8
      %s479 = sadd.s32 %s477, %s478
      %s480 = smul.addr %s479, 8
      %s481 = scalar_lea.vmem %s1, %s480
      // Predicated region
      $region33: #{tpu_custom_call.1} parent=23 // pred_check
        %p482 = pneg %p81
      $region34: #{tpu_custom_call.1} parent=23 // pred_check_branch
        %484 = sbr.rel (%p482) target = $region36
      $region35: #{tpu_custom_call.1} parent=23 // pred_region
        %s485 = smul.u32 8, %s18
      $region36: #{tpu_custom_call.1} parent=23 // pred_fallthru
        _
    $region24: #{tpu_custom_call.1} parent=5 // pred_fallthru
      _
    %p486 = scmp.le.s32.totalorder 2, %s7
    // Predicated region
    $region37: #{tpu_custom_call.1} parent=5 // pred_check
      %p487 = pneg %p486
    $region38: #{tpu_custom_call.1} parent=5 // pred_check_branch
      %489 = sbr.rel (%p487) target = $region40
    $region39: #{tpu_custom_call.1} parent=5 // pred_region
      %s490 = ssub.s32 %s7, 2
      // Predicated region
      $region41: #{tpu_custom_call.1} parent=39 // pred_check
        %p491 = pneg %p87
      $region42: #{tpu_custom_call.1} parent=39 // pred_check_branch
        %493 = sbr.rel (%p491) target = $region44
      $region43: #{tpu_custom_call.1} parent=39 // pred_region
        %s494 = smul.u32 8, %s21
        %p495 = scmp.lt.s32.totalorder %s20, 1
        %s496 = scalar_select %p495, %s20, 1
        %p497 = scmp.lt.s32.totalorder %s494, 7
        %s498 = scalar_select %p497, %s494, 7
        %s499 = smul.addr %s496, 8
        %s500 = sadd.s32 %s498, %s499
        %s501 = smul.addr %s500, 8
        %s502 = scalar_lea.vmem %s1, %s501
      $region44: #{tpu_custom_call.1} parent=39 // pred_fallthru
        _
    $region40: #{tpu_custom_call.1} parent=5 // pred_fallthru
      _
  $region6: #{tpu_custom_call.1} parent=0 // loop_footer
    %s11 = sadd.s32 1, %s7
  $region7: #{tpu_custom_call.1} parent=0 // loop_footer_branch
    %6 = sbr.rel target = $region3
  $region8: #{tpu_custom_call.1} parent=0 // loop_exit
    _

</llo_original>
